<compile_context>
chip_gen: v7x
topology: tpu7x:2x2x1
jax: 0.10.0
libtpu: 0.0.40
codegen_flags: <defaults>
</compile_context>

<pallas_src>
import jax
import jax.numpy as jnp
from jax import lax
from jax.experimental import pallas as pl
from jax.experimental.pallas import tpu as pltpu

N = 3          # nodes per frame (== hids[0], required by L(f_in, f_in))
NN = N * N     # flattened per-sample point components / graph entries
C = 8          # class_num
LANES = 128
M_PROB = 1.0
EPS = 1e-12    # guard for (m_prob * avg_dist)^2 == 0 (coincident points / padding)


# ----------------------------------------------------------------------------
# Fused kernel: graph build + HGNN_conv + node-max + Linear + softmax.
# ----------------------------------------------------------------------------
def _fused_hgnn_kernel(params_ref, pts_ref, out_ref):
    # params_ref: SMEM (20,) f32  = [theta(3), bias(1), w_cls(8), b_cls(8)]
    # pts_ref   : VMEM (9, TR, 128) f32, component j = node*3 + coord (last frame)
    # out_ref   : VMEM (8, TR, 128) f32, component c = class probability
    p = [[pts_ref[i * 3 + c] for c in range(3)] for i in range(N)]  # p[node][coord]
    zero = jnp.zeros_like(p[0][0])

    # Pairwise Euclidean distances (symmetric by construction, diag = 0).
    d = [[zero] * N for _ in range(N)]
    for i in range(N):
        for j in range(i + 1, N):
            d2 = ((p[i][0] - p[j][0]) ** 2
                  + (p[i][1] - p[j][1]) ** 2
                  + (p[i][2] - p[j][2]) ** 2)
            dij = jnp.sqrt(d2)
            d[i][j] = dij
            d[j][i] = dij

    # H[node, edge] = exp(-d[edge, node]^2 / (m_prob * avg_dist_edge)^2)
    # (K_neigs = 3 >= N -> every node is selected for every hyperedge.)
    H = [[None] * N for _ in range(N)]
    for e in range(N):
        avg = (d[e][0] + d[e][1] + d[e][2]) * (1.0 / 3.0)
        denom = jnp.maximum((M_PROB * avg) * (M_PROB * avg), EPS)
        inv_denom = 1.0 / denom
        for v in range(N):
            H[v][e] = jnp.exp(-(d[e][v] * d[e][v]) * inv_denom)

    # G = DV^{-1/2} H W DE^{-1} H^T DV^{-1/2}, with W = I.
    DV2 = [lax.rsqrt(H[v][0] + H[v][1] + H[v][2]) for v in range(N)]
    invDE = [1.0 / (H[0][e] + H[1][e] + H[2][e]) for e in range(N)]
    A = [[DV2[v] * H[v][e] * invDE[e] for e in range(N)] for v in range(N)]
    Bt = [[H[u][e] * DV2[u] for u in range(N)] for e in range(N)]
    G = [[A[v][0] * Bt[0][u] + A[v][1] * Bt[1][u] + A[v][2] * Bt[2][u]
          for u in range(N)] for v in range(N)]

    # HGNN_conv (called as L(G, G)): h = G @ (G @ theta + bias); theta (3,1).
    th = [params_ref[k] for k in range(3)]
    b0 = params_ref[3]
    tmp = [G[n][0] * th[0] + G[n][1] * th[1] + G[n][2] * th[2] + b0
           for n in range(N)]
    h = [G[n][0] * tmp[0] + G[n][1] * tmp[1] + G[n][2] * tmp[2]
         for n in range(N)]

    # max over nodes (torch .max(1)[0]) -> (TR, 128) per-sample scalar feature
    m = jnp.maximum(jnp.maximum(h[0], h[1]), h[2])

    # classifier (HID == 1): logits_c = m * w_c + b_c, then softmax over classes.
    logits = [m * params_ref[4 + c] + params_ref[12 + c] for c in range(C)]
    zmax = logits[0]
    for c in range(1, C):
        zmax = jnp.maximum(zmax, logits[c])
    es = [jnp.exp(logits[c] - zmax) for c in range(C)]
    ssum = es[0]
    for c in range(1, C):
        ssum = ssum + es[c]
    inv = pl.reciprocal(ssum, approx=True)
    for c in range(C):
        out_ref[c] = es[c] * inv            # lane-dense (TR, 128) stores


# ----------------------------------------------------------------------------
# Wrapper: layout plumbing + pallas_call.
# ----------------------------------------------------------------------------
def framewise_hgnn_forward(x, theta, bias, w_cls, b_cls, *, max_block_rows=8):
    # x: (B, T, V, 3) point coordinates; V must equal 3 (== hids[0]).
    B, _, V, _ = x.shape
    assert V == N and theta.shape == (N, 1) and w_cls.shape == (C, 1)

    # Last frame's points, flattened per sample: component j = node*3 + coord.
    pts = x[:, -1].reshape(B, NN).astype(jnp.float32)          # (B, 9)

    # Pack batch as (rows, 128 lanes); up to max_block_rows rows per grid step.
    R = -(-B // LANES)
    TR = min(max_block_rows, R)
    R_pad = -(-R // TR) * TR
    B_pad = R_pad * LANES
    pts = jnp.pad(pts, ((0, B_pad - B), (0, 0)))
    pts_cm = pts.T.reshape(NN, R_pad, LANES)                   # component-major

    # All 20 weight scalars go to SMEM in one small vector.
    params = jnp.concatenate([
        theta.reshape(-1), bias.reshape(-1),
        w_cls.reshape(-1), b_cls.reshape(-1)]).astype(jnp.float32)   # (20,)

    out_cm = pl.pallas_call(
        _fused_hgnn_kernel,
        out_shape=jax.ShapeDtypeStruct((C, R_pad, LANES), jnp.float32),
        grid_spec=pltpu.PrefetchScalarGridSpec(
            num_scalar_prefetch=0,
            grid=(R_pad // TR,),
            in_specs=[
                pl.BlockSpec(memory_space=pltpu.MemorySpace.SMEM),   # weights
                pl.BlockSpec((NN, TR, LANES), lambda r: (0, r, 0)),  # points
            ],
            out_specs=pl.BlockSpec((C, TR, LANES), lambda r: (0, r, 0)),
        ),
        compiler_params=pltpu.CompilerParams(
            dimension_semantics=("parallel",)),
    )(params, pts_cm)

    return out_cm.reshape(C, B_pad).T[:B]                      # (B, C)


# ----------------------------------------------------------------------------
# Pure-JAX reference (same semantics) for correctness checking.
# ----------------------------------------------------------------------------
def _reference_forward(x, theta, bias, w_cls, b_cls):
    B = x.shape[0]
    pts = x[:, -1].reshape(B, N, 3).astype(jnp.float32)

    def gen_g(ft):
        aa = jnp.sum(ft * ft, axis=1)
        d2 = jnp.maximum(aa[:, None] + aa[None, :] - 2.0 * (ft @ ft.T), 0.0)
        d = jnp.sqrt(d2)
        d = jnp.maximum(d, d.T)
        avg = jnp.mean(d, axis=1)
        denom = jnp.maximum((M_PROB * avg) ** 2, EPS)
        prob = jnp.exp(-(d ** 2) / denom[:, None])             # prob[center, node]
        H = prob.T                                             # H[node, edge]
        DV = jnp.sum(H, axis=1)
        DE = jnp.sum(H, axis=0)
        return (DV ** -0.5)[:, None] * H * (1.0 / DE)[None, :] @ (H.T * (DV ** -0.5)[None, :])

    G = jax.vmap(gen_g)(pts)                                   # (B, 3, 3)
    h = jnp.einsum('bij,bjk->bik', G, G @ theta + bias[None, None, :])
    m = jnp.max(h, axis=1)                                     # (B, 1)
    logits = m @ w_cls.T + b_cls[None, :]                      # (B, 8)
    return jax.nn.softmax(logits, axis=1)


def init_params(key, hids=(3, 1), class_num=8):
    k0, k1, k2, k3 = jax.random.split(key, 4)
    in_ft, out_ft = hids[0], hids[1]
    theta = jax.random.normal(k0, (in_ft, out_ft), jnp.float32) * 0.5    # HGNN_conv weight
    bias = jax.random.normal(k1, (out_ft,), jnp.float32) * 0.1           # HGNN_conv bias
    w_cls = jax.random.normal(k2, (class_num, out_ft), jnp.float32) * 0.5  # nn.Linear (out, in)
    b_cls = jax.random.normal(k3, (class_num,), jnp.float32) * 0.1
    return theta, bias, w_cls, b_cls


if __name__ == "__main__":
    key = jax.random.PRNGKey(0)
    kx, kp = jax.random.split(key)

    # x: (B, T, V, 3); V == hids[0] == 3 so that L(f_in, f_in) type-checks,
    # exactly as the original module requires.
    B, T, V = 2, 4, 3
    x = jax.random.normal(kx, (B, T, V, 3), jnp.float32)
    theta, bias, w_cls, b_cls = init_params(kp, hids=(3, 1), class_num=8)

    fwd = jax.jit(framewise_hgnn_forward)
    out = jax.block_until_ready(fwd(x, theta, bias, w_cls, b_cls))

    assert out.shape == (B, 8)
    assert bool(jnp.all(jnp.isfinite(out)))
    assert bool(jnp.allclose(jnp.sum(out, axis=1), 1.0, atol=2e-3))

    ref = _reference_forward(x, theta, bias, w_cls, b_cls)
    assert bool(jnp.allclose(out, ref, rtol=2e-3, atol=2e-3))

    print("KERNEL_OK")
</pallas_src>

<mosaic_0001>
module attributes {stable_mosaic.version = 11 : i64} {
  func.func @_fused_hgnn_kernel(%arg0: i32, %arg1: memref<20xf32, #tpu.memory_space<smem>>, %arg2: memref<9x1x128xf32, #tpu.memory_space<vmem>>, %arg3: memref<8x1x128xf32, #tpu.memory_space<vmem>>) attributes {dimension_semantics = [#tpu.dimension_semantics<parallel>], iteration_bounds = array<i64: 1>, scalar_prefetch = 0 : i64, scratch_operands = 0 : i64, tpu.core_type = #tpu.core_type<tc>, window_params = [{transform_indices = @transform_0, window_bounds = array<i64: 20>}, {transform_indices = @transform_1, window_bounds = array<i64: 9, 1, 128>}, {transform_indices = @transform_2, window_bounds = array<i64: 8, 1, 128>}]} {
    %c0 = arith.constant 0 : index
    %c0_0 = arith.constant 0 : index
    %c0_1 = arith.constant 0 : index
    %0 = vector.load %arg2[%c0, %c0_0, %c0_1] : memref<9x1x128xf32, #tpu.memory_space<vmem>>, vector<1x1x128xf32>
    %1 = vector.shape_cast %0 : vector<1x1x128xf32> to vector<1x128xf32>
    %c1 = arith.constant 1 : index
    %c0_2 = arith.constant 0 : index
    %c0_3 = arith.constant 0 : index
    %2 = vector.load %arg2[%c1, %c0_2, %c0_3] : memref<9x1x128xf32, #tpu.memory_space<vmem>>, vector<1x1x128xf32>
    %3 = vector.shape_cast %2 : vector<1x1x128xf32> to vector<1x128xf32>
    %c2 = arith.constant 2 : index
    %c0_4 = arith.constant 0 : index
    %c0_5 = arith.constant 0 : index
    %4 = vector.load %arg2[%c2, %c0_4, %c0_5] : memref<9x1x128xf32, #tpu.memory_space<vmem>>, vector<1x1x128xf32>
    %5 = vector.shape_cast %4 : vector<1x1x128xf32> to vector<1x128xf32>
    %c3 = arith.constant 3 : index
    %c0_6 = arith.constant 0 : index
    %c0_7 = arith.constant 0 : index
    %6 = vector.load %arg2[%c3, %c0_6, %c0_7] : memref<9x1x128xf32, #tpu.memory_space<vmem>>, vector<1x1x128xf32>
    %7 = vector.shape_cast %6 : vector<1x1x128xf32> to vector<1x128xf32>
    %c4 = arith.constant 4 : index
    %c0_8 = arith.constant 0 : index
    %c0_9 = arith.constant 0 : index
    %8 = vector.load %arg2[%c4, %c0_8, %c0_9] : memref<9x1x128xf32, #tpu.memory_space<vmem>>, vector<1x1x128xf32>
    %9 = vector.shape_cast %8 : vector<1x1x128xf32> to vector<1x128xf32>
    %c5 = arith.constant 5 : index
    %c0_10 = arith.constant 0 : index
    %c0_11 = arith.constant 0 : index
    %10 = vector.load %arg2[%c5, %c0_10, %c0_11] : memref<9x1x128xf32, #tpu.memory_space<vmem>>, vector<1x1x128xf32>
    %11 = vector.shape_cast %10 : vector<1x1x128xf32> to vector<1x128xf32>
    %c6 = arith.constant 6 : index
    %c0_12 = arith.constant 0 : index
    %c0_13 = arith.constant 0 : index
    %12 = vector.load %arg2[%c6, %c0_12, %c0_13] : memref<9x1x128xf32, #tpu.memory_space<vmem>>, vector<1x1x128xf32>
    %13 = vector.shape_cast %12 : vector<1x1x128xf32> to vector<1x128xf32>
    %c7 = arith.constant 7 : index
    %c0_14 = arith.constant 0 : index
    %c0_15 = arith.constant 0 : index
    %14 = vector.load %arg2[%c7, %c0_14, %c0_15] : memref<9x1x128xf32, #tpu.memory_space<vmem>>, vector<1x1x128xf32>
    %15 = vector.shape_cast %14 : vector<1x1x128xf32> to vector<1x128xf32>
    %c8 = arith.constant 8 : index
    %c0_16 = arith.constant 0 : index
    %c0_17 = arith.constant 0 : index
    %16 = vector.load %arg2[%c8, %c0_16, %c0_17] : memref<9x1x128xf32, #tpu.memory_space<vmem>>, vector<1x1x128xf32>
    %17 = vector.shape_cast %16 : vector<1x1x128xf32> to vector<1x128xf32>
    %cst = arith.constant 0.000000e+00 : f32
    %18 = vector.broadcast %cst : f32 to vector<1x128xf32>
    %19 = arith.subf %1, %7 : vector<1x128xf32>
    %20 = arith.mulf %19, %19 : vector<1x128xf32>
    %21 = arith.subf %3, %9 : vector<1x128xf32>
    %22 = arith.mulf %21, %21 : vector<1x128xf32>
    %23 = arith.addf %20, %22 : vector<1x128xf32>
    %24 = arith.subf %5, %11 : vector<1x128xf32>
    %25 = arith.mulf %24, %24 : vector<1x128xf32>
    %26 = arith.addf %23, %25 : vector<1x128xf32>
    %27 = math.sqrt %26 : vector<1x128xf32>
    %28 = arith.subf %1, %13 : vector<1x128xf32>
    %29 = arith.mulf %28, %28 : vector<1x128xf32>
    %30 = arith.subf %3, %15 : vector<1x128xf32>
    %31 = arith.mulf %30, %30 : vector<1x128xf32>
    %32 = arith.addf %29, %31 : vector<1x128xf32>
    %33 = arith.subf %5, %17 : vector<1x128xf32>
    %34 = arith.mulf %33, %33 : vector<1x128xf32>
    %35 = arith.addf %32, %34 : vector<1x128xf32>
    %36 = math.sqrt %35 : vector<1x128xf32>
    %37 = arith.subf %7, %13 : vector<1x128xf32>
    %38 = arith.mulf %37, %37 : vector<1x128xf32>
    %39 = arith.subf %9, %15 : vector<1x128xf32>
    %40 = arith.mulf %39, %39 : vector<1x128xf32>
    %41 = arith.addf %38, %40 : vector<1x128xf32>
    %42 = arith.subf %11, %17 : vector<1x128xf32>
    %43 = arith.mulf %42, %42 : vector<1x128xf32>
    %44 = arith.addf %41, %43 : vector<1x128xf32>
    %45 = math.sqrt %44 : vector<1x128xf32>
    %46 = arith.addf %18, %27 : vector<1x128xf32>
    %47 = arith.addf %46, %36 : vector<1x128xf32>
    %cst_18 = arith.constant 0.333333343 : f32
    %48 = vector.broadcast %cst_18 : f32 to vector<1x128xf32>
    %49 = arith.mulf %47, %48 : vector<1x128xf32>
    %cst_19 = arith.constant 1.000000e+00 : f32
    %50 = vector.broadcast %cst_19 : f32 to vector<1x128xf32>
    %51 = arith.mulf %50, %49 : vector<1x128xf32>
    %cst_20 = arith.constant 1.000000e+00 : f32
    %52 = vector.broadcast %cst_20 : f32 to vector<1x128xf32>
    %53 = arith.mulf %52, %49 : vector<1x128xf32>
    %54 = arith.mulf %51, %53 : vector<1x128xf32>
    %cst_21 = arith.constant 9.99999996E-13 : f32
    %55 = vector.broadcast %cst_21 : f32 to vector<1x128xf32>
    %56 = arith.maximumf %54, %55 : vector<1x128xf32>
    %cst_22 = arith.constant 1.000000e+00 : f32
    %57 = vector.broadcast %cst_22 : f32 to vector<1x128xf32>
    %58 = arith.divf %57, %56 : vector<1x128xf32>
    %59 = arith.mulf %18, %18 : vector<1x128xf32>
    %cst_23 = arith.constant 0.000000e+00 : f32
    %60 = vector.broadcast %cst_23 : f32 to vector<1x128xf32>
    %61 = arith.subf %60, %59 : vector<1x128xf32>
    %62 = arith.mulf %61, %58 : vector<1x128xf32>
    %63 = math.exp %62 : vector<1x128xf32>
    %64 = arith.mulf %27, %27 : vector<1x128xf32>
    %cst_24 = arith.constant 0.000000e+00 : f32
    %65 = vector.broadcast %cst_24 : f32 to vector<1x128xf32>
    %66 = arith.subf %65, %64 : vector<1x128xf32>
    %67 = arith.mulf %66, %58 : vector<1x128xf32>
    %68 = math.exp %67 : vector<1x128xf32>
    %69 = arith.mulf %36, %36 : vector<1x128xf32>
    %cst_25 = arith.constant 0.000000e+00 : f32
    %70 = vector.broadcast %cst_25 : f32 to vector<1x128xf32>
    %71 = arith.subf %70, %69 : vector<1x128xf32>
    %72 = arith.mulf %71, %58 : vector<1x128xf32>
    %73 = math.exp %72 : vector<1x128xf32>
    %74 = arith.addf %27, %18 : vector<1x128xf32>
    %75 = arith.addf %74, %45 : vector<1x128xf32>
    %cst_26 = arith.constant 0.333333343 : f32
    %76 = vector.broadcast %cst_26 : f32 to vector<1x128xf32>
    %77 = arith.mulf %75, %76 : vector<1x128xf32>
    %cst_27 = arith.constant 1.000000e+00 : f32
    %78 = vector.broadcast %cst_27 : f32 to vector<1x128xf32>
    %79 = arith.mulf %78, %77 : vector<1x128xf32>
    %cst_28 = arith.constant 1.000000e+00 : f32
    %80 = vector.broadcast %cst_28 : f32 to vector<1x128xf32>
    %81 = arith.mulf %80, %77 : vector<1x128xf32>
    %82 = arith.mulf %79, %81 : vector<1x128xf32>
    %cst_29 = arith.constant 9.99999996E-13 : f32
    %83 = vector.broadcast %cst_29 : f32 to vector<1x128xf32>
    %84 = arith.maximumf %82, %83 : vector<1x128xf32>
    %cst_30 = arith.constant 1.000000e+00 : f32
    %85 = vector.broadcast %cst_30 : f32 to vector<1x128xf32>
    %86 = arith.divf %85, %84 : vector<1x128xf32>
    %87 = arith.mulf %27, %27 : vector<1x128xf32>
    %cst_31 = arith.constant 0.000000e+00 : f32
    %88 = vector.broadcast %cst_31 : f32 to vector<1x128xf32>
    %89 = arith.subf %88, %87 : vector<1x128xf32>
    %90 = arith.mulf %89, %86 : vector<1x128xf32>
    %91 = math.exp %90 : vector<1x128xf32>
    %92 = arith.mulf %18, %18 : vector<1x128xf32>
    %cst_32 = arith.constant 0.000000e+00 : f32
    %93 = vector.broadcast %cst_32 : f32 to vector<1x128xf32>
    %94 = arith.subf %93, %92 : vector<1x128xf32>
    %95 = arith.mulf %94, %86 : vector<1x128xf32>
    %96 = math.exp %95 : vector<1x128xf32>
    %97 = arith.mulf %45, %45 : vector<1x128xf32>
    %cst_33 = arith.constant 0.000000e+00 : f32
    %98 = vector.broadcast %cst_33 : f32 to vector<1x128xf32>
    %99 = arith.subf %98, %97 : vector<1x128xf32>
    %100 = arith.mulf %99, %86 : vector<1x128xf32>
    %101 = math.exp %100 : vector<1x128xf32>
    %102 = arith.addf %36, %45 : vector<1x128xf32>
    %103 = arith.addf %102, %18 : vector<1x128xf32>
    %cst_34 = arith.constant 0.333333343 : f32
    %104 = vector.broadcast %cst_34 : f32 to vector<1x128xf32>
    %105 = arith.mulf %103, %104 : vector<1x128xf32>
    %cst_35 = arith.constant 1.000000e+00 : f32
    %106 = vector.broadcast %cst_35 : f32 to vector<1x128xf32>
    %107 = arith.mulf %106, %105 : vector<1x128xf32>
    %cst_36 = arith.constant 1.000000e+00 : f32
    %108 = vector.broadcast %cst_36 : f32 to vector<1x128xf32>
    %109 = arith.mulf %108, %105 : vector<1x128xf32>
    %110 = arith.mulf %107, %109 : vector<1x128xf32>
    %cst_37 = arith.constant 9.99999996E-13 : f32
    %111 = vector.broadcast %cst_37 : f32 to vector<1x128xf32>
    %112 = arith.maximumf %110, %111 : vector<1x128xf32>
    %cst_38 = arith.constant 1.000000e+00 : f32
    %113 = vector.broadcast %cst_38 : f32 to vector<1x128xf32>
    %114 = arith.divf %113, %112 : vector<1x128xf32>
    %115 = arith.mulf %36, %36 : vector<1x128xf32>
    %cst_39 = arith.constant 0.000000e+00 : f32
    %116 = vector.broadcast %cst_39 : f32 to vector<1x128xf32>
    %117 = arith.subf %116, %115 : vector<1x128xf32>
    %118 = arith.mulf %117, %114 : vector<1x128xf32>
    %119 = math.exp %118 : vector<1x128xf32>
    %120 = arith.mulf %45, %45 : vector<1x128xf32>
    %cst_40 = arith.constant 0.000000e+00 : f32
    %121 = vector.broadcast %cst_40 : f32 to vector<1x128xf32>
    %122 = arith.subf %121, %120 : vector<1x128xf32>
    %123 = arith.mulf %122, %114 : vector<1x128xf32>
    %124 = math.exp %123 : vector<1x128xf32>
    %125 = arith.mulf %18, %18 : vector<1x128xf32>
    %cst_41 = arith.constant 0.000000e+00 : f32
    %126 = vector.broadcast %cst_41 : f32 to vector<1x128xf32>
    %127 = arith.subf %126, %125 : vector<1x128xf32>
    %128 = arith.mulf %127, %114 : vector<1x128xf32>
    %129 = math.exp %128 : vector<1x128xf32>
    %130 = arith.addf %63, %91 : vector<1x128xf32>
    %131 = arith.addf %130, %119 : vector<1x128xf32>
    %132 = math.rsqrt %131 : vector<1x128xf32>
    %133 = arith.addf %68, %96 : vector<1x128xf32>
    %134 = arith.addf %133, %124 : vector<1x128xf32>
    %135 = math.rsqrt %134 : vector<1x128xf32>
    %136 = arith.addf %73, %101 : vector<1x128xf32>
    %137 = arith.addf %136, %129 : vector<1x128xf32>
    %138 = math.rsqrt %137 : vector<1x128xf32>
    %139 = arith.addf %63, %68 : vector<1x128xf32>
    %140 = arith.addf %139, %73 : vector<1x128xf32>
    %cst_42 = arith.constant 1.000000e+00 : f32
    %141 = vector.broadcast %cst_42 : f32 to vector<1x128xf32>
    %142 = arith.divf %141, %140 : vector<1x128xf32>
    %143 = arith.addf %91, %96 : vector<1x128xf32>
    %144 = arith.addf %143, %101 : vector<1x128xf32>
    %cst_43 = arith.constant 1.000000e+00 : f32
    %145 = vector.broadcast %cst_43 : f32 to vector<1x128xf32>
    %146 = arith.divf %145, %144 : vector<1x128xf32>
    %147 = arith.addf %119, %124 : vector<1x128xf32>
    %148 = arith.addf %147, %129 : vector<1x128xf32>
    %cst_44 = arith.constant 1.000000e+00 : f32
    %149 = vector.broadcast %cst_44 : f32 to vector<1x128xf32>
    %150 = arith.divf %149, %148 : vector<1x128xf32>
    %151 = arith.mulf %132, %63 : vector<1x128xf32>
    %152 = arith.mulf %151, %142 : vector<1x128xf32>
    %153 = arith.mulf %132, %91 : vector<1x128xf32>
    %154 = arith.mulf %153, %146 : vector<1x128xf32>
    %155 = arith.mulf %132, %119 : vector<1x128xf32>
    %156 = arith.mulf %155, %150 : vector<1x128xf32>
    %157 = arith.mulf %135, %68 : vector<1x128xf32>
    %158 = arith.mulf %157, %142 : vector<1x128xf32>
    %159 = arith.mulf %135, %96 : vector<1x128xf32>
    %160 = arith.mulf %159, %146 : vector<1x128xf32>
    %161 = arith.mulf %135, %124 : vector<1x128xf32>
    %162 = arith.mulf %161, %150 : vector<1x128xf32>
    %163 = arith.mulf %138, %73 : vector<1x128xf32>
    %164 = arith.mulf %163, %142 : vector<1x128xf32>
    %165 = arith.mulf %138, %101 : vector<1x128xf32>
    %166 = arith.mulf %165, %146 : vector<1x128xf32>
    %167 = arith.mulf %138, %129 : vector<1x128xf32>
    %168 = arith.mulf %167, %150 : vector<1x128xf32>
    %169 = arith.mulf %63, %132 : vector<1x128xf32>
    %170 = arith.mulf %68, %135 : vector<1x128xf32>
    %171 = arith.mulf %73, %138 : vector<1x128xf32>
    %172 = arith.mulf %91, %132 : vector<1x128xf32>
    %173 = arith.mulf %96, %135 : vector<1x128xf32>
    %174 = arith.mulf %101, %138 : vector<1x128xf32>
    %175 = arith.mulf %119, %132 : vector<1x128xf32>
    %176 = arith.mulf %124, %135 : vector<1x128xf32>
    %177 = arith.mulf %129, %138 : vector<1x128xf32>
    %178 = arith.mulf %152, %169 : vector<1x128xf32>
    %179 = arith.mulf %154, %172 : vector<1x128xf32>
    %180 = arith.addf %178, %179 : vector<1x128xf32>
    %181 = arith.mulf %156, %175 : vector<1x128xf32>
    %182 = arith.addf %180, %181 : vector<1x128xf32>
    %183 = arith.mulf %152, %170 : vector<1x128xf32>
    %184 = arith.mulf %154, %173 : vector<1x128xf32>
    %185 = arith.addf %183, %184 : vector<1x128xf32>
    %186 = arith.mulf %156, %176 : vector<1x128xf32>
    %187 = arith.addf %185, %186 : vector<1x128xf32>
    %188 = arith.mulf %152, %171 : vector<1x128xf32>
    %189 = arith.mulf %154, %174 : vector<1x128xf32>
    %190 = arith.addf %188, %189 : vector<1x128xf32>
    %191 = arith.mulf %156, %177 : vector<1x128xf32>
    %192 = arith.addf %190, %191 : vector<1x128xf32>
    %193 = arith.mulf %158, %169 : vector<1x128xf32>
    %194 = arith.mulf %160, %172 : vector<1x128xf32>
    %195 = arith.addf %193, %194 : vector<1x128xf32>
    %196 = arith.mulf %162, %175 : vector<1x128xf32>
    %197 = arith.addf %195, %196 : vector<1x128xf32>
    %198 = arith.mulf %158, %170 : vector<1x128xf32>
    %199 = arith.mulf %160, %173 : vector<1x128xf32>
    %200 = arith.addf %198, %199 : vector<1x128xf32>
    %201 = arith.mulf %162, %176 : vector<1x128xf32>
    %202 = arith.addf %200, %201 : vector<1x128xf32>
    %203 = arith.mulf %158, %171 : vector<1x128xf32>
    %204 = arith.mulf %160, %174 : vector<1x128xf32>
    %205 = arith.addf %203, %204 : vector<1x128xf32>
    %206 = arith.mulf %162, %177 : vector<1x128xf32>
    %207 = arith.addf %205, %206 : vector<1x128xf32>
    %208 = arith.mulf %164, %169 : vector<1x128xf32>
    %209 = arith.mulf %166, %172 : vector<1x128xf32>
    %210 = arith.addf %208, %209 : vector<1x128xf32>
    %211 = arith.mulf %168, %175 : vector<1x128xf32>
    %212 = arith.addf %210, %211 : vector<1x128xf32>
    %213 = arith.mulf %164, %170 : vector<1x128xf32>
    %214 = arith.mulf %166, %173 : vector<1x128xf32>
    %215 = arith.addf %213, %214 : vector<1x128xf32>
    %216 = arith.mulf %168, %176 : vector<1x128xf32>
    %217 = arith.addf %215, %216 : vector<1x128xf32>
    %218 = arith.mulf %164, %171 : vector<1x128xf32>
    %219 = arith.mulf %166, %174 : vector<1x128xf32>
    %220 = arith.addf %218, %219 : vector<1x128xf32>
    %221 = arith.mulf %168, %177 : vector<1x128xf32>
    %222 = arith.addf %220, %221 : vector<1x128xf32>
    %c0_45 = arith.constant 0 : index
    %223 = memref.load %arg1[%c0_45] : memref<20xf32, #tpu.memory_space<smem>>
    %c1_46 = arith.constant 1 : index
    %224 = memref.load %arg1[%c1_46] : memref<20xf32, #tpu.memory_space<smem>>
    %c2_47 = arith.constant 2 : index
    %225 = memref.load %arg1[%c2_47] : memref<20xf32, #tpu.memory_space<smem>>
    %c3_48 = arith.constant 3 : index
    %226 = memref.load %arg1[%c3_48] : memref<20xf32, #tpu.memory_space<smem>>
    %227 = vector.broadcast %223 : f32 to vector<1x128xf32>
    %228 = arith.mulf %182, %227 : vector<1x128xf32>
    %229 = vector.broadcast %224 : f32 to vector<1x128xf32>
    %230 = arith.mulf %187, %229 : vector<1x128xf32>
    %231 = arith.addf %228, %230 : vector<1x128xf32>
    %232 = vector.broadcast %225 : f32 to vector<1x128xf32>
    %233 = arith.mulf %192, %232 : vector<1x128xf32>
    %234 = arith.addf %231, %233 : vector<1x128xf32>
    %235 = vector.broadcast %226 : f32 to vector<1x128xf32>
    %236 = arith.addf %234, %235 : vector<1x128xf32>
    %237 = vector.broadcast %223 : f32 to vector<1x128xf32>
    %238 = arith.mulf %197, %237 : vector<1x128xf32>
    %239 = vector.broadcast %224 : f32 to vector<1x128xf32>
    %240 = arith.mulf %202, %239 : vector<1x128xf32>
    %241 = arith.addf %238, %240 : vector<1x128xf32>
    %242 = vector.broadcast %225 : f32 to vector<1x128xf32>
    %243 = arith.mulf %207, %242 : vector<1x128xf32>
    %244 = arith.addf %241, %243 : vector<1x128xf32>
    %245 = vector.broadcast %226 : f32 to vector<1x128xf32>
    %246 = arith.addf %244, %245 : vector<1x128xf32>
    %247 = vector.broadcast %223 : f32 to vector<1x128xf32>
    %248 = arith.mulf %212, %247 : vector<1x128xf32>
    %249 = vector.broadcast %224 : f32 to vector<1x128xf32>
    %250 = arith.mulf %217, %249 : vector<1x128xf32>
    %251 = arith.addf %248, %250 : vector<1x128xf32>
    %252 = vector.broadcast %225 : f32 to vector<1x128xf32>
    %253 = arith.mulf %222, %252 : vector<1x128xf32>
    %254 = arith.addf %251, %253 : vector<1x128xf32>
    %255 = vector.broadcast %226 : f32 to vector<1x128xf32>
    %256 = arith.addf %254, %255 : vector<1x128xf32>
    %257 = arith.mulf %182, %236 : vector<1x128xf32>
    %258 = arith.mulf %187, %246 : vector<1x128xf32>
    %259 = arith.addf %257, %258 : vector<1x128xf32>
    %260 = arith.mulf %192, %256 : vector<1x128xf32>
    %261 = arith.addf %259, %260 : vector<1x128xf32>
    %262 = arith.mulf %197, %236 : vector<1x128xf32>
    %263 = arith.mulf %202, %246 : vector<1x128xf32>
    %264 = arith.addf %262, %263 : vector<1x128xf32>
    %265 = arith.mulf %207, %256 : vector<1x128xf32>
    %266 = arith.addf %264, %265 : vector<1x128xf32>
    %267 = arith.mulf %212, %236 : vector<1x128xf32>
    %268 = arith.mulf %217, %246 : vector<1x128xf32>
    %269 = arith.addf %267, %268 : vector<1x128xf32>
    %270 = arith.mulf %222, %256 : vector<1x128xf32>
    %271 = arith.addf %269, %270 : vector<1x128xf32>
    %272 = arith.maximumf %261, %266 : vector<1x128xf32>
    %273 = arith.maximumf %272, %271 : vector<1x128xf32>
    %c4_49 = arith.constant 4 : index
    %274 = memref.load %arg1[%c4_49] : memref<20xf32, #tpu.memory_space<smem>>
    %275 = vector.broadcast %274 : f32 to vector<1x128xf32>
    %276 = arith.mulf %273, %275 : vector<1x128xf32>
    %c12 = arith.constant 12 : index
    %277 = memref.load %arg1[%c12] : memref<20xf32, #tpu.memory_space<smem>>
    %278 = vector.broadcast %277 : f32 to vector<1x128xf32>
    %279 = arith.addf %276, %278 : vector<1x128xf32>
    %c5_50 = arith.constant 5 : index
    %280 = memref.load %arg1[%c5_50] : memref<20xf32, #tpu.memory_space<smem>>
    %281 = vector.broadcast %280 : f32 to vector<1x128xf32>
    %282 = arith.mulf %273, %281 : vector<1x128xf32>
    %c13 = arith.constant 13 : index
    %283 = memref.load %arg1[%c13] : memref<20xf32, #tpu.memory_space<smem>>
    %284 = vector.broadcast %283 : f32 to vector<1x128xf32>
    %285 = arith.addf %282, %284 : vector<1x128xf32>
    %c6_51 = arith.constant 6 : index
    %286 = memref.load %arg1[%c6_51] : memref<20xf32, #tpu.memory_space<smem>>
    %287 = vector.broadcast %286 : f32 to vector<1x128xf32>
    %288 = arith.mulf %273, %287 : vector<1x128xf32>
    %c14 = arith.constant 14 : index
    %289 = memref.load %arg1[%c14] : memref<20xf32, #tpu.memory_space<smem>>
    %290 = vector.broadcast %289 : f32 to vector<1x128xf32>
    %291 = arith.addf %288, %290 : vector<1x128xf32>
    %c7_52 = arith.constant 7 : index
    %292 = memref.load %arg1[%c7_52] : memref<20xf32, #tpu.memory_space<smem>>
    %293 = vector.broadcast %292 : f32 to vector<1x128xf32>
    %294 = arith.mulf %273, %293 : vector<1x128xf32>
    %c15 = arith.constant 15 : index
    %295 = memref.load %arg1[%c15] : memref<20xf32, #tpu.memory_space<smem>>
    %296 = vector.broadcast %295 : f32 to vector<1x128xf32>
    %297 = arith.addf %294, %296 : vector<1x128xf32>
    %c8_53 = arith.constant 8 : index
    %298 = memref.load %arg1[%c8_53] : memref<20xf32, #tpu.memory_space<smem>>
    %299 = vector.broadcast %298 : f32 to vector<1x128xf32>
    %300 = arith.mulf %273, %299 : vector<1x128xf32>
    %c16 = arith.constant 16 : index
    %301 = memref.load %arg1[%c16] : memref<20xf32, #tpu.memory_space<smem>>
    %302 = vector.broadcast %301 : f32 to vector<1x128xf32>
    %303 = arith.addf %300, %302 : vector<1x128xf32>
    %c9 = arith.constant 9 : index
    %304 = memref.load %arg1[%c9] : memref<20xf32, #tpu.memory_space<smem>>
    %305 = vector.broadcast %304 : f32 to vector<1x128xf32>
    %306 = arith.mulf %273, %305 : vector<1x128xf32>
    %c17 = arith.constant 17 : index
    %307 = memref.load %arg1[%c17] : memref<20xf32, #tpu.memory_space<smem>>
    %308 = vector.broadcast %307 : f32 to vector<1x128xf32>
    %309 = arith.addf %306, %308 : vector<1x128xf32>
    %c10 = arith.constant 10 : index
    %310 = memref.load %arg1[%c10] : memref<20xf32, #tpu.memory_space<smem>>
    %311 = vector.broadcast %310 : f32 to vector<1x128xf32>
    %312 = arith.mulf %273, %311 : vector<1x128xf32>
    %c18 = arith.constant 18 : index
    %313 = memref.load %arg1[%c18] : memref<20xf32, #tpu.memory_space<smem>>
    %314 = vector.broadcast %313 : f32 to vector<1x128xf32>
    %315 = arith.addf %312, %314 : vector<1x128xf32>
    %c11 = arith.constant 11 : index
    %316 = memref.load %arg1[%c11] : memref<20xf32, #tpu.memory_space<smem>>
    %317 = vector.broadcast %316 : f32 to vector<1x128xf32>
    %318 = arith.mulf %273, %317 : vector<1x128xf32>
    %c19 = arith.constant 19 : index
    %319 = memref.load %arg1[%c19] : memref<20xf32, #tpu.memory_space<smem>>
    %320 = vector.broadcast %319 : f32 to vector<1x128xf32>
    %321 = arith.addf %318, %320 : vector<1x128xf32>
    %322 = arith.maximumf %279, %285 : vector<1x128xf32>
    %323 = arith.maximumf %322, %291 : vector<1x128xf32>
    %324 = arith.maximumf %323, %297 : vector<1x128xf32>
    %325 = arith.maximumf %324, %303 : vector<1x128xf32>
    %326 = arith.maximumf %325, %309 : vector<1x128xf32>
    %327 = arith.maximumf %326, %315 : vector<1x128xf32>
    %328 = arith.maximumf %327, %321 : vector<1x128xf32>
    %329 = arith.subf %279, %328 : vector<1x128xf32>
    %330 = math.exp %329 : vector<1x128xf32>
    %331 = arith.subf %285, %328 : vector<1x128xf32>
    %332 = math.exp %331 : vector<1x128xf32>
    %333 = arith.subf %291, %328 : vector<1x128xf32>
    %334 = math.exp %333 : vector<1x128xf32>
    %335 = arith.subf %297, %328 : vector<1x128xf32>
    %336 = math.exp %335 : vector<1x128xf32>
    %337 = arith.subf %303, %328 : vector<1x128xf32>
    %338 = math.exp %337 : vector<1x128xf32>
    %339 = arith.subf %309, %328 : vector<1x128xf32>
    %340 = math.exp %339 : vector<1x128xf32>
    %341 = arith.subf %315, %328 : vector<1x128xf32>
    %342 = math.exp %341 : vector<1x128xf32>
    %343 = arith.subf %321, %328 : vector<1x128xf32>
    %344 = math.exp %343 : vector<1x128xf32>
    %345 = arith.addf %330, %332 : vector<1x128xf32>
    %346 = arith.addf %345, %334 : vector<1x128xf32>
    %347 = arith.addf %346, %336 : vector<1x128xf32>
    %348 = arith.addf %347, %338 : vector<1x128xf32>
    %349 = arith.addf %348, %340 : vector<1x128xf32>
    %350 = arith.addf %349, %342 : vector<1x128xf32>
    %351 = arith.addf %350, %344 : vector<1x128xf32>
    %352 = tpu.reciprocal %351 {approx = true} : vector<1x128xf32> -> vector<1x128xf32>
    %353 = arith.mulf %330, %352 : vector<1x128xf32>
    %c0_54 = arith.constant 0 : index
    %c0_55 = arith.constant 0 : index
    %c0_56 = arith.constant 0 : index
    %354 = vector.load %arg3[%c0_54, %c0_55, %c0_56] : memref<8x1x128xf32, #tpu.memory_space<vmem>>, vector<1x1x128xf32>
    %355 = vector.shape_cast %354 : vector<1x1x128xf32> to vector<1x128xf32>
    %356 = vector.shape_cast %353 : vector<1x128xf32> to vector<1x1x128xf32>
    tpu.vector_store %arg3[%c0_54, %c0_55, %c0_56], %356 {strides = array<i32>} : memref<8x1x128xf32, #tpu.memory_space<vmem>>, vector<1x1x128xf32>,
    %357 = arith.mulf %332, %352 : vector<1x128xf32>
    %c1_57 = arith.constant 1 : index
    %c0_58 = arith.constant 0 : index
    %c0_59 = arith.constant 0 : index
    %358 = vector.load %arg3[%c1_57, %c0_58, %c0_59] : memref<8x1x128xf32, #tpu.memory_space<vmem>>, vector<1x1x128xf32>
    %359 = vector.shape_cast %358 : vector<1x1x128xf32> to vector<1x128xf32>
    %360 = vector.shape_cast %357 : vector<1x128xf32> to vector<1x1x128xf32>
    tpu.vector_store %arg3[%c1_57, %c0_58, %c0_59], %360 {strides = array<i32>} : memref<8x1x128xf32, #tpu.memory_space<vmem>>, vector<1x1x128xf32>,
    %361 = arith.mulf %334, %352 : vector<1x128xf32>
    %c2_60 = arith.constant 2 : index
    %c0_61 = arith.constant 0 : index
    %c0_62 = arith.constant 0 : index
    %362 = vector.load %arg3[%c2_60, %c0_61, %c0_62] : memref<8x1x128xf32, #tpu.memory_space<vmem>>, vector<1x1x128xf32>
    %363 = vector.shape_cast %362 : vector<1x1x128xf32> to vector<1x128xf32>
    %364 = vector.shape_cast %361 : vector<1x128xf32> to vector<1x1x128xf32>
    tpu.vector_store %arg3[%c2_60, %c0_61, %c0_62], %364 {strides = array<i32>} : memref<8x1x128xf32, #tpu.memory_space<vmem>>, vector<1x1x128xf32>,
    %365 = arith.mulf %336, %352 : vector<1x128xf32>
    %c3_63 = arith.constant 3 : index
    %c0_64 = arith.constant 0 : index
    %c0_65 = arith.constant 0 : index
    %366 = vector.load %arg3[%c3_63, %c0_64, %c0_65] : memref<8x1x128xf32, #tpu.memory_space<vmem>>, vector<1x1x128xf32>
    %367 = vector.shape_cast %366 : vector<1x1x128xf32> to vector<1x128xf32>
    %368 = vector.shape_cast %365 : vector<1x128xf32> to vector<1x1x128xf32>
    tpu.vector_store %arg3[%c3_63, %c0_64, %c0_65], %368 {strides = array<i32>} : memref<8x1x128xf32, #tpu.memory_space<vmem>>, vector<1x1x128xf32>,
    %369 = arith.mulf %338, %352 : vector<1x128xf32>
    %c4_66 = arith.constant 4 : index
    %c0_67 = arith.constant 0 : index
    %c0_68 = arith.constant 0 : index
    %370 = vector.load %arg3[%c4_66, %c0_67, %c0_68] : memref<8x1x128xf32, #tpu.memory_space<vmem>>, vector<1x1x128xf32>
    %371 = vector.shape_cast %370 : vector<1x1x128xf32> to vector<1x128xf32>
    %372 = vector.shape_cast %369 : vector<1x128xf32> to vector<1x1x128xf32>
    tpu.vector_store %arg3[%c4_66, %c0_67, %c0_68], %372 {strides = array<i32>} : memref<8x1x128xf32, #tpu.memory_space<vmem>>, vector<1x1x128xf32>,
    %373 = arith.mulf %340, %352 : vector<1x128xf32>
    %c5_69 = arith.constant 5 : index
    %c0_70 = arith.constant 0 : index
    %c0_71 = arith.constant 0 : index
    %374 = vector.load %arg3[%c5_69, %c0_70, %c0_71] : memref<8x1x128xf32, #tpu.memory_space<vmem>>, vector<1x1x128xf32>
    %375 = vector.shape_cast %374 : vector<1x1x128xf32> to vector<1x128xf32>
    %376 = vector.shape_cast %373 : vector<1x128xf32> to vector<1x1x128xf32>
    tpu.vector_store %arg3[%c5_69, %c0_70, %c0_71], %376 {strides = array<i32>} : memref<8x1x128xf32, #tpu.memory_space<vmem>>, vector<1x1x128xf32>,
    %377 = arith.mulf %342, %352 : vector<1x128xf32>
    %c6_72 = arith.constant 6 : index
    %c0_73 = arith.constant 0 : index
    %c0_74 = arith.constant 0 : index
    %378 = vector.load %arg3[%c6_72, %c0_73, %c0_74] : memref<8x1x128xf32, #tpu.memory_space<vmem>>, vector<1x1x128xf32>
    %379 = vector.shape_cast %378 : vector<1x1x128xf32> to vector<1x128xf32>
    %380 = vector.shape_cast %377 : vector<1x128xf32> to vector<1x1x128xf32>
    tpu.vector_store %arg3[%c6_72, %c0_73, %c0_74], %380 {strides = array<i32>} : memref<8x1x128xf32, #tpu.memory_space<vmem>>, vector<1x1x128xf32>,
    %381 = arith.mulf %344, %352 : vector<1x128xf32>
    %c7_75 = arith.constant 7 : index
    %c0_76 = arith.constant 0 : index
    %c0_77 = arith.constant 0 : index
    %382 = vector.load %arg3[%c7_75, %c0_76, %c0_77] : memref<8x1x128xf32, #tpu.memory_space<vmem>>, vector<1x1x128xf32>
    %383 = vector.shape_cast %382 : vector<1x1x128xf32> to vector<1x128xf32>
    %384 = vector.shape_cast %381 : vector<1x128xf32> to vector<1x1x128xf32>
    tpu.vector_store %arg3[%c7_75, %c0_76, %c0_77], %384 {strides = array<i32>} : memref<8x1x128xf32, #tpu.memory_space<vmem>>, vector<1x1x128xf32>,
    return
  }
  func.func @transform_0(%arg0: i32) -> i32 {
    %c0_i32 = arith.constant 0 : i32
    %c0_i32_0 = arith.constant 0 : i32
    return %c0_i32 : i32
  }
  func.func @transform_1(%arg0: i32) -> (i32, i32, i32) {
    %c0_i32 = arith.constant 0 : i32
    %c0_i32_0 = arith.constant 0 : i32
    %c0_i32_1 = arith.constant 0 : i32
    return %c0_i32, %arg0, %c0_i32_0 : i32, i32, i32
  }
  func.func @transform_2(%arg0: i32) -> (i32, i32, i32) {
    %c0_i32 = arith.constant 0 : i32
    %c0_i32_0 = arith.constant 0 : i32
    %c0_i32_1 = arith.constant 0 : i32
    return %c0_i32, %arg0, %c0_i32_0 : i32, i32, i32
  }
}

</mosaic_0001>

<llo_original>
// kernel: framewise_hgnn_forward.1
$region0: #{framewise_hgnn_forward.1}
  #allocation0 [shape = 'u32[]', space=smem, size = 0x4, offset = 0x4, fixed_abs, tag = 'smem constant byte address 0x4 - core index']
  #allocation1 [shape = 'u32[144,128]{1,0:T(1,128)}', space=vmem, size = 0x12000, scoped, tag = 'internal scratch']
  %s0 = inlined_call_operand.vmem [shape: f32[20], index: 0, kind: input, shape index: {}]
  %s1 = inlined_call_operand.vmem [shape: f32[9,1,128], index: 1, kind: input, shape index: {}]
  %s2 = inlined_call_operand.vmem [shape: f32[8,1,128], index: 2, kind: output, shape index: {}]
  %s3 = sld [smem:[#allocation0]]
  $region22: #{framewise_hgnn_forward.1} parent=0
    _
  %s5 = ssub.s32 1, %s3
  %s6 = scalar_select 0, %s5, %s3
  $region1: #{framewise_hgnn_forward.1} parent=0
    #allocation2 [shape = 'u8[512]{0}', space=smem, size = 0x200, scoped, tag = 'input window, operand 0, single buffered']
    #allocation3 [shape = 's32[1]{0}', space=sflag, size = 0x4, scoped, tag = 'scoped memory for framewise_hgnn_forward.1']
    %7 = vsyncpa [#allocation3], 0
    // Predicated region
    $region2: #{framewise_hgnn_forward.1} parent=1 // pred_check
      _
    $region3: #{framewise_hgnn_forward.1} parent=1 // pred_check_branch
      %9 = sbr.rel (0) target = $region5
    $region4: #{framewise_hgnn_forward.1} parent=1 // pred_region
      %s11 = ssub.s32 16, 16
      %12 = vsyncadd [#allocation3], %s11
      %s14 = sshll.u32 %s0, 4
      %s15 = int_to_ptr.vmem [resolvable:$true] %s14
      %17 = dma.vmem_to_smem %s15, 16, [#allocation2], [#allocation3]
    $region5: #{framewise_hgnn_forward.1} parent=1 // pred_fallthru
      _
    // Predicated region
    $region6: #{framewise_hgnn_forward.1} parent=1 // pred_check
      _
    $region7: #{framewise_hgnn_forward.1} parent=1 // pred_check_branch
      %19 = sbr.rel (0) target = $region9
    $region8: #{framewise_hgnn_forward.1} parent=1 // pred_region
      _
    $region9: #{framewise_hgnn_forward.1} parent=1 // pred_fallthru
      _
    // Predicated region
    $region10: #{framewise_hgnn_forward.1} parent=1 // pred_check
      _
    $region11: #{framewise_hgnn_forward.1} parent=1 // pred_check_branch
      %21 = sbr.rel (0) target = $region13
    $region12: #{framewise_hgnn_forward.1} parent=1 // pred_region
      %22 = dma.done [#allocation3], 16
    $region13: #{framewise_hgnn_forward.1} parent=1 // pred_fallthru
      _
    %23 = sfence
    %v24 = vld [vmem:[%s1] sm:$0x1]
    %s25 = scalar_lea.vmem %s1, 1
    %v26 = vld [vmem:[%s25] sm:$0x1]
    %s27 = scalar_lea.vmem %s1, 2
    %v28 = vld [vmem:[%s27] sm:$0x1]
    %s29 = scalar_lea.vmem %s1, 3
    %v30 = vld [vmem:[%s29] sm:$0x1]
    %s31 = scalar_lea.vmem %s1, 4
    %v32 = vld [vmem:[%s31] sm:$0x1]
    %s33 = scalar_lea.vmem %s1, 5
    %v34 = vld [vmem:[%s33] sm:$0x1]
    %s35 = scalar_lea.vmem %s1, 6
    %v36 = vld [vmem:[%s35] sm:$0x1]
    %s37 = scalar_lea.vmem %s1, 7
    %v38 = vld [vmem:[%s37] sm:$0x1]
    %s39 = scalar_lea.vmem %s1, 8
    %v40 = vld [vmem:[%s39] sm:$0x1]
    %v41 = vsub.f32 %v24, %v30
    %v42 = vmul.f32 %v41, %v41
    %v43 = vsub.f32 %v26, %v32
    %v44 = vmul.f32 %v43, %v43
    %v45 = vadd.f32 %v42, %v44
    %v46 = vsub.f32 %v28, %v34
    %v47 = vmul.f32 %v46, %v46
    %v48 = vadd.f32 %v45, %v47
    %v49 = vrsqrt.pop %v48
    %v50 = vmul.f32 %v48, %v49
    %vm51 = vcmp.eq.f32.partialorder %v48, inf
    %v52 = vsel %vm51, %v48, %v50
    %vm53 = vcmp.eq.f32.partialorder %v48, 0.0
    %v54 = vand.u32 %v48, 2147483648
    %v55 = vsel %vm53, %v54, %v52
    %v56 = vsub.f32 %v24, %v36
    %v57 = vmul.f32 %v56, %v56
    %v58 = vsub.f32 %v26, %v38
    %v59 = vmul.f32 %v58, %v58
    %v60 = vadd.f32 %v57, %v59
    %v61 = vsub.f32 %v28, %v40
    %v62 = vmul.f32 %v61, %v61
    %v63 = vadd.f32 %v60, %v62
    %v64 = vrsqrt.pop %v63
    %v65 = vmul.f32 %v63, %v64
    %vm66 = vcmp.eq.f32.partialorder %v63, inf
    %v67 = vsel %vm66, %v63, %v65
    %vm68 = vcmp.eq.f32.partialorder %v63, 0.0
    %v69 = vand.u32 %v63, 2147483648
    %v70 = vsel %vm68, %v69, %v67
    %v71 = vsub.f32 %v30, %v36
    %v72 = vmul.f32 %v71, %v71
    %v73 = vsub.f32 %v32, %v38
    %v74 = vmul.f32 %v73, %v73
    %v75 = vadd.f32 %v72, %v74
    %v76 = vsub.f32 %v34, %v40
    %v77 = vmul.f32 %v76, %v76
    %v78 = vadd.f32 %v75, %v77
    %v79 = vrsqrt.pop %v78
    %v80 = vmul.f32 %v78, %v79
    %vm81 = vcmp.eq.f32.partialorder %v78, inf
    %v82 = vsel %vm81, %v78, %v80
    %vm83 = vcmp.eq.f32.partialorder %v78, 0.0
    %v84 = vand.u32 %v78, 2147483648
    %v85 = vsel %vm83, %v84, %v82
    %v86 = vadd.f32 %v55, 0.0
    %v87 = vadd.f32 %v86, %v70
    %v88 = vmul.f32 %v87, 0.33333334
    %v89 = vmul.f32 %v88, %v88
    %v90 = vmax.f32 %v89, 1e-12
    %v91 = vrcp.pop %v90
    %v92 = vmul.f32 1.0, %v91
    %v93 = vmul.f32 %v92, 0.0
    %v94 = vmul.f32 %v93, 1.442695
    %v95 = vpow.pop %v94
    %v96 = vmul.f32 %v55, %v55
    %v97 = vsub.f32 0.0, %v96
    %v98 = vmul.f32 %v97, %v92
    %v99 = vmul.f32 %v98, 1.442695
    %v100 = vpow.pop %v99
    %v101 = vmul.f32 %v70, %v70
    %v102 = vsub.f32 0.0, %v101
    %v103 = vmul.f32 %v102, %v92
    %v104 = vmul.f32 %v103, 1.442695
    %v105 = vpow.pop %v104
    %v106 = vadd.f32 %v86, %v85
    %v107 = vmul.f32 %v106, 0.33333334
    %v108 = vmul.f32 %v107, %v107
    %v109 = vmax.f32 %v108, 1e-12
    %v110 = vrcp.pop %v109
    %v111 = vmul.f32 1.0, %v110
    %v112 = vmul.f32 %v97, %v111
    %v113 = vmul.f32 %v112, 1.442695
    %v114 = vpow.pop %v113
    %v115 = vmul.f32 %v111, 0.0
    %v116 = vmul.f32 %v115, 1.442695
    %v117 = vpow.pop %v116
    %v118 = vmul.f32 %v85, %v85
    %v119 = vsub.f32 0.0, %v118
    %v120 = vmul.f32 %v119, %v111
    %v121 = vmul.f32 %v120, 1.442695
    %v122 = vpow.pop %v121
    %v123 = vadd.f32 %v70, %v85
    %v124 = vadd.f32 %v123, 0.0
    %v125 = vmul.f32 %v124, 0.33333334
    %v126 = vmul.f32 %v125, %v125
    %v127 = vmax.f32 %v126, 1e-12
    %v128 = vrcp.pop %v127
    %v129 = vmul.f32 1.0, %v128
    %v130 = vmul.f32 %v102, %v129
    %v131 = vmul.f32 %v130, 1.442695
    %v132 = vpow.pop %v131
    %v133 = vmul.f32 %v119, %v129
    %v134 = vmul.f32 %v133, 1.442695
    %v135 = vpow.pop %v134
    %v136 = vmul.f32 %v129, 0.0
    %v137 = vmul.f32 %v136, 1.442695
    %v138 = vpow.pop %v137
    %v139 = vadd.f32 %v95, %v114
    %v140 = vadd.f32 %v139, %v132
    %v141 = vrsqrt.pop %v140
    %v142 = vadd.f32 %v100, %v117
    %v143 = vadd.f32 %v142, %v135
    %v144 = vrsqrt.pop %v143
    %v145 = vadd.f32 %v105, %v122
    %v146 = vadd.f32 %v145, %v138
    %v147 = vrsqrt.pop %v146
    %v148 = vadd.f32 %v95, %v100
    %v149 = vadd.f32 %v148, %v105
    %v150 = vrcp.pop %v149
    %v151 = vmul.f32 1.0, %v150
    %v152 = vadd.f32 %v114, %v117
    %v153 = vadd.f32 %v152, %v122
    %v154 = vrcp.pop %v153
    %v155 = vmul.f32 1.0, %v154
    %v156 = vadd.f32 %v132, %v135
    %v157 = vadd.f32 %v156, %v138
    %v158 = vrcp.pop %v157
    %v159 = vmul.f32 1.0, %v158
    %v160 = vmul.f32 %v141, %v95
    %v161 = vmul.f32 %v160, %v151
    %v162 = vmul.f32 %v141, %v114
    %v163 = vmul.f32 %v162, %v155
    %v164 = vmul.f32 %v141, %v132
    %v165 = vmul.f32 %v164, %v159
    %v166 = vmul.f32 %v144, %v100
    %v167 = vmul.f32 %v166, %v151
    %v168 = vmul.f32 %v144, %v117
    %v169 = vmul.f32 %v168, %v155
    %v170 = vmul.f32 %v144, %v135
    %v171 = vmul.f32 %v170, %v159
    %v172 = vmul.f32 %v147, %v105
    %v173 = vmul.f32 %v172, %v151
    %v174 = vmul.f32 %v147, %v122
    %v175 = vmul.f32 %v174, %v155
    %v176 = vmul.f32 %v147, %v138
    %v177 = vmul.f32 %v176, %v159
    %v178 = vmul.f32 %v161, %v160
    %v179 = vmul.f32 %v163, %v162
    %v180 = vadd.f32 %v178, %v179
    %v181 = vmul.f32 %v165, %v164
    %v182 = vadd.f32 %v180, %v181
    %v183 = vmul.f32 %v161, %v166
    %v184 = vmul.f32 %v163, %v168
    %v185 = vadd.f32 %v183, %v184
    %v186 = vmul.f32 %v165, %v170
    %v187 = vadd.f32 %v185, %v186
    %v188 = vmul.f32 %v161, %v172
    %v189 = vmul.f32 %v163, %v174
    %v190 = vadd.f32 %v188, %v189
    %v191 = vmul.f32 %v165, %v176
    %v192 = vadd.f32 %v190, %v191
    %v193 = vmul.f32 %v167, %v160
    %v194 = vmul.f32 %v169, %v162
    %v195 = vadd.f32 %v193, %v194
    %v196 = vmul.f32 %v171, %v164
    %v197 = vadd.f32 %v195, %v196
    %v198 = vmul.f32 %v167, %v166
    %v199 = vmul.f32 %v169, %v168
    %v200 = vadd.f32 %v198, %v199
    %v201 = vmul.f32 %v171, %v170
    %v202 = vadd.f32 %v200, %v201
    %v203 = vmul.f32 %v167, %v172
    %v204 = vmul.f32 %v169, %v174
    %v205 = vadd.f32 %v203, %v204
    %v206 = vmul.f32 %v171, %v176
    %v207 = vadd.f32 %v205, %v206
    %v208 = vmul.f32 %v173, %v160
    %v209 = vmul.f32 %v175, %v162
    %v210 = vadd.f32 %v208, %v209
    %v211 = vmul.f32 %v177, %v164
    %v212 = vadd.f32 %v210, %v211
    %v213 = vmul.f32 %v173, %v166
    %v214 = vmul.f32 %v175, %v168
    %v215 = vadd.f32 %v213, %v214
    %v216 = vmul.f32 %v177, %v170
    %v217 = vadd.f32 %v215, %v216
    %v218 = vmul.f32 %v173, %v172
    %v219 = vmul.f32 %v175, %v174
    %v220 = vadd.f32 %v218, %v219
    %v221 = vmul.f32 %v177, %v176
    %v222 = vadd.f32 %v220, %v221
    %s223 = sld [smem:[#allocation2]]
    %s224 = sld [smem:[#allocation2 + $0x1]]
    %s225 = sld [smem:[#allocation2 + $0x2]]
    %s226 = sld [smem:[#allocation2 + $0x3]]
    %v227 = vstv %s223
    %v228 = vmul.f32 %v182, %v227
    %v229 = vstv %s224
    %v230 = vmul.f32 %v187, %v229
    %v231 = vadd.f32 %v228, %v230
    %v232 = vstv %s225
    %v233 = vmul.f32 %v192, %v232
    %v234 = vadd.f32 %v231, %v233
    %v235 = vstv %s226
    %v236 = vadd.f32 %v234, %v235
    %v237 = vmul.f32 %v197, %v227
    %v238 = vmul.f32 %v202, %v229
    %v239 = vadd.f32 %v237, %v238
    %v240 = vmul.f32 %v207, %v232
    %v241 = vadd.f32 %v239, %v240
    %v242 = vadd.f32 %v241, %v235
    %v243 = vmul.f32 %v212, %v227
    %v244 = vmul.f32 %v217, %v229
    %v245 = vadd.f32 %v243, %v244
    %v246 = vmul.f32 %v222, %v232
    %v247 = vadd.f32 %v245, %v246
    %v248 = vadd.f32 %v247, %v235
    %v249 = vmul.f32 %v182, %v236
    %v250 = vmul.f32 %v187, %v242
    %v251 = vadd.f32 %v249, %v250
    %v252 = vmul.f32 %v192, %v248
    %v253 = vadd.f32 %v251, %v252
    %v254 = vmul.f32 %v197, %v236
    %v255 = vmul.f32 %v202, %v242
    %v256 = vadd.f32 %v254, %v255
    %v257 = vmul.f32 %v207, %v248
    %v258 = vadd.f32 %v256, %v257
    %v259 = vmul.f32 %v212, %v236
    %v260 = vmul.f32 %v217, %v242
    %v261 = vadd.f32 %v259, %v260
    %v262 = vmul.f32 %v222, %v248
    %v263 = vadd.f32 %v261, %v262
    %v264 = vmax.f32 %v253, %v258
    %v265 = vmax.f32 %v264, %v263
    %s266 = sld [smem:[#allocation2 + $0x4]]
    %v267 = vstv %s266
    %v268 = vmul.f32 %v265, %v267
    %s269 = sld [smem:[#allocation2 + $0xc]]
    %v270 = vstv %s269
    %v271 = vadd.f32 %v268, %v270
    %s272 = sld [smem:[#allocation2 + $0x5]]
    %v273 = vstv %s272
    %v274 = vmul.f32 %v265, %v273
    %s275 = sld [smem:[#allocation2 + $0xd]]
    %v276 = vstv %s275
    %v277 = vadd.f32 %v274, %v276
    %s278 = sld [smem:[#allocation2 + $0x6]]
    %v279 = vstv %s278
    %v280 = vmul.f32 %v265, %v279
    %s281 = sld [smem:[#allocation2 + $0xe]]
    %v282 = vstv %s281
    %v283 = vadd.f32 %v280, %v282
    %s284 = sld [smem:[#allocation2 + $0x7]]
    %v285 = vstv %s284
    %v286 = vmul.f32 %v265, %v285
    %s287 = sld [smem:[#allocation2 + $0xf]]
    %v288 = vstv %s287
    %v289 = vadd.f32 %v286, %v288
    %s290 = sld [smem:[#allocation2 + $0x8]]
    %v291 = vstv %s290
    %v292 = vmul.f32 %v265, %v291
    %s293 = sld [smem:[#allocation2 + $0x10]]
    %v294 = vstv %s293
    %v295 = vadd.f32 %v292, %v294
    %s296 = sld [smem:[#allocation2 + $0x9]]
    %v297 = vstv %s296
    %v298 = vmul.f32 %v265, %v297
    %s299 = sld [smem:[#allocation2 + $0x11]]
    %v300 = vstv %s299
    %v301 = vadd.f32 %v298, %v300
    %s302 = sld [smem:[#allocation2 + $0xa]]
    %v303 = vstv %s302
    %v304 = vmul.f32 %v265, %v303
    %s305 = sld [smem:[#allocation2 + $0x12]]
    %v306 = vstv %s305
    %v307 = vadd.f32 %v304, %v306
    %s308 = sld [smem:[#allocation2 + $0xb]]
    %v309 = vstv %s308
    %v310 = vmul.f32 %v265, %v309
    %s311 = sld [smem:[#allocation2 + $0x13]]
    %v312 = vstv %s311
    %v313 = vadd.f32 %v310, %v312
    %v314 = vmax.f32 %v271, %v277
    %v315 = vmax.f32 %v314, %v283
    %v316 = vmax.f32 %v315, %v289
    %v317 = vmax.f32 %v316, %v295
    %v318 = vmax.f32 %v317, %v301
    %v319 = vmax.f32 %v318, %v307
    %v320 = vmax.f32 %v319, %v313
    %v321 = vsub.f32 %v271, %v320
    %v322 = vmul.f32 %v321, 1.442695
    %v323 = vpow.pop %v322
    %v324 = vsub.f32 %v277, %v320
    %v325 = vmul.f32 %v324, 1.442695
    %v326 = vpow.pop %v325
    %v327 = vsub.f32 %v283, %v320
    %v328 = vmul.f32 %v327, 1.442695
    %v329 = vpow.pop %v328
    %v330 = vsub.f32 %v289, %v320
    %v331 = vmul.f32 %v330, 1.442695
    %v332 = vpow.pop %v331
    %v333 = vsub.f32 %v295, %v320
    %v334 = vmul.f32 %v333, 1.442695
    %v335 = vpow.pop %v334
    %v336 = vsub.f32 %v301, %v320
    %v337 = vmul.f32 %v336, 1.442695
    %v338 = vpow.pop %v337
    %v339 = vsub.f32 %v307, %v320
    %v340 = vmul.f32 %v339, 1.442695
    %v341 = vpow.pop %v340
    %v342 = vsub.f32 %v313, %v320
    %v343 = vmul.f32 %v342, 1.442695
    %v344 = vpow.pop %v343
    %v345 = vadd.f32 %v323, %v326
    %v346 = vadd.f32 %v345, %v329
    %v347 = vadd.f32 %v346, %v332
    %v348 = vadd.f32 %v347, %v335
    %v349 = vadd.f32 %v348, %v338
    %v350 = vadd.f32 %v349, %v341
    %v351 = vadd.f32 %v350, %v344
    %v352 = vrcp.pop %v351
    %v353 = vmul.f32 %v323, %v352
    %354 = vst [vmem:[%s2] sm:$0x1] %v353
    %v355 = vmul.f32 %v326, %v352
    %s356 = scalar_lea.vmem %s2, 1
    %357 = vst [vmem:[%s356] sm:$0x1] %v355
    %v358 = vmul.f32 %v329, %v352
    %s359 = scalar_lea.vmem %s2, 2
    %360 = vst [vmem:[%s359] sm:$0x1] %v358
    %v361 = vmul.f32 %v332, %v352
    %s362 = scalar_lea.vmem %s2, 3
    %363 = vst [vmem:[%s362] sm:$0x1] %v361
    %v364 = vmul.f32 %v335, %v352
    %s365 = scalar_lea.vmem %s2, 4
    %366 = vst [vmem:[%s365] sm:$0x1] %v364
    %v367 = vmul.f32 %v338, %v352
    %s368 = scalar_lea.vmem %s2, 5
    %369 = vst [vmem:[%s368] sm:$0x1] %v367
    %v370 = vmul.f32 %v341, %v352
    %s371 = scalar_lea.vmem %s2, 6
    %372 = vst [vmem:[%s371] sm:$0x1] %v370
    %v373 = vmul.f32 %v344, %v352
    %s374 = scalar_lea.vmem %s2, 7
    %375 = vst [vmem:[%s374] sm:$0x1] %v373
    // Predicated region
    $region14: #{framewise_hgnn_forward.1} parent=1 // pred_check
      _
    $region15: #{framewise_hgnn_forward.1} parent=1 // pred_check_branch
      %377 = sbr.rel (0) target = $region17
    $region16: #{framewise_hgnn_forward.1} parent=1 // pred_region
      _
    $region17: #{framewise_hgnn_forward.1} parent=1 // pred_fallthru
      _
    // Predicated region
    $region18: #{framewise_hgnn_forward.1} parent=1 // pred_check
      _
    $region19: #{framewise_hgnn_forward.1} parent=1 // pred_check_branch
      %379 = sbr.rel (0) target = $region21
    $region20: #{framewise_hgnn_forward.1} parent=1 // pred_region
      _
    $region21: #{framewise_hgnn_forward.1} parent=1 // pred_fallthru
      _
    %380 = vsyncpa [#allocation3], 1

</llo_original>
